<compile_context>
chip_gen: v6e
topology: v6e:2x2x1
jax: 0.10.0
libtpu: 0.0.40
codegen_flags: <defaults>
</compile_context>

<pallas_src>
import jax
import jax.numpy as jnp
from jax.experimental import pallas as pl
from jax.experimental.pallas import tpu as pltpu

F32 = jnp.float32


# --------------------------------------------------------------------------
# Fused kernel: embedding lookup + packed gate projections + gating.
# --------------------------------------------------------------------------
def _generate_node_kernel(ne_ref, cc_ref, lbl_ref, emb_ref,
                          w_ne_ref, w_cc_ref, w_e_ref, b_ref,
                          lr_ref, label_ref):
    ne = ne_ref[...]                     # (B, H)   node_embedding (squeezed)
    cc = cc_ref[...]                     # (B, H)   current_context (squeezed)
    labels = lbl_ref[...]                # (B, 1)   int32 op labels
    emb = emb_ref[...]                   # (O, E)   embedding table

    B, H = ne.shape
    O = emb.shape[0]

    # Embedding lookup as an exact one-hot matmul (MXU friendly, no gather).
    onehot = (labels == jax.lax.broadcasted_iota(jnp.int32, (B, O), 1)).astype(F32)
    lbl_emb = jnp.dot(onehot, emb, preferred_element_type=F32)        # (B, E)
    label_ref[...] = lbl_emb             # node_label_ output (pre-dropout)

    # Packed projection, columns = [l | r | lg | rg].  Computed as a sum of
    # three MXU matmuls (one per input chunk) -- no in-kernel concat needed.
    y = (jnp.dot(ne, w_ne_ref[...], preferred_element_type=F32)
         + jnp.dot(cc, w_cc_ref[...], preferred_element_type=F32)
         + jnp.dot(lbl_emb, w_e_ref[...], preferred_element_type=F32)
         + b_ref[...])                                                # (B, 4H)

    # tanh half (first 2H lanes) * sigmoid half (last 2H lanes)
    lr_ref[...] = jnp.tanh(y[:, :2 * H]) * jax.nn.sigmoid(y[:, 2 * H:])


def _vmem():
    return pl.BlockSpec(memory_space=pltpu.MemorySpace.VMEM)


def generate_node_forward(p, node_embedding, node_label, current_context):
    """Pallas equivalent of GenerateNode.forward (eval mode)."""
    B = node_embedding.shape[0]
    H = node_embedding.shape[-1]
    E = p["embedding"].shape[-1]

    ne = node_embedding.reshape(B, H)          # .squeeze(1)
    cc = current_context.reshape(B, H)         # .squeeze(1)
    lbl = node_label.astype(jnp.int32).reshape(B, 1)

    out_shapes = (jax.ShapeDtypeStruct((B, 2 * H), F32),   # [l_child | r_child]
                  jax.ShapeDtypeStruct((B, E), F32))       # node_label_

    lr, node_label_ = pl.pallas_call(
        _generate_node_kernel,
        out_shape=out_shapes,
        in_specs=[_vmem()] * 8,
        out_specs=(_vmem(), _vmem()),
    )(ne, cc, lbl, p["embedding"],
      p["w_packed_ne"], p["w_packed_cc"], p["w_packed_e"], p["b_packed"])

    l_child = lr[:, :H]
    r_child = lr[:, H:]
    return l_child, r_child, node_label_


# --------------------------------------------------------------------------
# Parameters (deterministic, in-script).  Weights stored as (in, out).
# --------------------------------------------------------------------------
def init_params(key, hidden_size, op_nums, embedding_size):
    keys = iter(jax.random.split(key, 16))
    H = hidden_size
    din = 2 * H + embedding_size

    def lin(dout):
        w = jax.random.normal(next(keys), (din, dout), F32) / jnp.sqrt(float(din))
        b = jax.random.normal(next(keys), (dout,), F32) * 0.05
        return w, b

    w_l, b_l = lin(H)
    w_lg, b_lg = lin(H)
    w_r, b_r = lin(H)
    w_rg, b_rg = lin(H)

    p = {
        "embedding": jax.random.normal(next(keys), (op_nums, embedding_size), F32),
        "w_l": w_l, "b_l": b_l,
        "w_lg": w_lg, "b_lg": b_lg,
        "w_r": w_r, "b_r": b_r,
        "w_rg": w_rg, "b_rg": b_rg,
    }
    # Packed weights for the fused kernel: columns = [l | r | lg | rg],
    # split into row blocks for the three input chunks (ne | cc | label_emb).
    w_packed = jnp.concatenate([w_l, w_r, w_lg, w_rg], axis=1)        # (din, 4H)
    p["w_packed_ne"] = w_packed[0 * H:1 * H, :]                       # (H, 4H)
    p["w_packed_cc"] = w_packed[1 * H:2 * H, :]                       # (H, 4H)
    p["w_packed_e"] = w_packed[2 * H:, :]                             # (E, 4H)
    p["b_packed"] = jnp.concatenate([b_l, b_r, b_lg, b_rg], axis=0)[None, :]  # (1, 4H)
    return p


# --------------------------------------------------------------------------
# Pure-JAX reference (mirrors the PyTorch module 1:1, eval mode).
# --------------------------------------------------------------------------
def generate_node_ref(p, node_embedding, node_label, current_context):
    node_label_ = p["embedding"][node_label]             # nn.Embedding lookup
    ne = node_embedding.squeeze(1)
    cc = current_context.squeeze(1)
    x = jnp.concatenate([ne, cc, node_label_], axis=1)   # (B, 2H+E)
    l = jnp.tanh(x @ p["w_l"] + p["b_l"]) * jax.nn.sigmoid(x @ p["w_lg"] + p["b_lg"])
    r = jnp.tanh(x @ p["w_r"] + p["b_r"]) * jax.nn.sigmoid(x @ p["w_rg"] + p["b_rg"])
    return l, r, node_label_


# --------------------------------------------------------------------------
if __name__ == "__main__":
    H, O, E = 32, 4, 32          # hidden_size, op_nums, embedding_size
    B = 2                        # batch

    key = jax.random.PRNGKey(0)
    kp, k1, k2, k3 = jax.random.split(key, 4)
    params = init_params(kp, H, O, E)

    node_embedding = jax.random.normal(k1, (B, 1, H), F32)
    current_context = jax.random.normal(k2, (B, 1, H), F32)
    node_label = jax.random.randint(k3, (B,), 0, O, dtype=jnp.int32)

    outs_k = generate_node_forward(params, node_embedding, node_label, current_context)
    jax.block_until_ready(outs_k)

    outs_r = generate_node_ref(params, node_embedding, node_label, current_context)

    names = ["l_child", "r_child", "node_label_"]
    for name, a, b in zip(names, outs_k, outs_r):
        assert a.shape == b.shape, (name, a.shape, b.shape)
        if not bool(jnp.allclose(a, b, rtol=1e-2, atol=1e-2)):
            raise AssertionError(
                f"{name} mismatch, max abs diff = {float(jnp.max(jnp.abs(a - b)))}")

    print("KERNEL_OK")
</pallas_src>

<mosaic_0001>
module attributes {stable_mosaic.version = 11 : i64} {
  func.func @_generate_node_kernel(%arg0: memref<2x32xf32, #tpu.memory_space<vmem>>, %arg1: memref<2x32xf32, #tpu.memory_space<vmem>>, %arg2: memref<2x1xi32, #tpu.memory_space<vmem>>, %arg3: memref<4x32xf32, #tpu.memory_space<vmem>>, %arg4: memref<32x128xf32, #tpu.memory_space<vmem>>, %arg5: memref<32x128xf32, #tpu.memory_space<vmem>>, %arg6: memref<32x128xf32, #tpu.memory_space<vmem>>, %arg7: memref<1x128xf32, #tpu.memory_space<vmem>>, %arg8: memref<2x64xf32, #tpu.memory_space<vmem>>, %arg9: memref<2x32xf32, #tpu.memory_space<vmem>>) attributes {dimension_semantics = [], scalar_prefetch = 0 : i64, scratch_operands = 0 : i64, tpu.core_type = #tpu.core_type<tc>} {
    %c0 = arith.constant 0 : index
    %c0_0 = arith.constant 0 : index
    %0 = vector.load %arg0[%c0, %c0_0] : memref<2x32xf32, #tpu.memory_space<vmem>>, vector<2x32xf32>
    %c0_1 = arith.constant 0 : index
    %c0_2 = arith.constant 0 : index
    %1 = vector.load %arg1[%c0_1, %c0_2] : memref<2x32xf32, #tpu.memory_space<vmem>>, vector<2x32xf32>
    %c0_3 = arith.constant 0 : index
    %c0_4 = arith.constant 0 : index
    %2 = vector.load %arg2[%c0_3, %c0_4] : memref<2x1xi32, #tpu.memory_space<vmem>>, vector<2x1xi32>
    %c0_5 = arith.constant 0 : index
    %c0_6 = arith.constant 0 : index
    %3 = vector.load %arg3[%c0_5, %c0_6] : memref<4x32xf32, #tpu.memory_space<vmem>>, vector<4x32xf32>
    %4 = tpu.iota {dimensions = array<i32: 1>} : vector<2x4xi32>
    %5 = vector.broadcast %2 : vector<2x1xi32> to vector<2x4xi32>
    %6 = arith.cmpi eq, %5, %4 : vector<2x4xi32>
    %7 = arith.extui %6 : vector<2x4xi1> to vector<2x4xi32>
    %8 = arith.sitofp %7 : vector<2x4xi32> to vector<2x4xf32>
    %cst = arith.constant dense<0.000000e+00> : vector<2x32xf32>
    %9 = tpu.matmul %8, %3, %cst {dimension_numbers = #tpu.dot_dimension_numbers<[1], [0], [0], [1], [0, 0, 1, 1], [], []>} : vector<2x4xf32>, vector<4x32xf32>, vector<2x32xf32> -> vector<2x32xf32>
    %c0_7 = arith.constant 0 : index
    %c0_8 = arith.constant 0 : index
    %10 = vector.load %arg9[%c0_7, %c0_8] : memref<2x32xf32, #tpu.memory_space<vmem>>, vector<2x32xf32>
    tpu.vector_store %arg9[%c0_7, %c0_8], %9 {strides = array<i32>} : memref<2x32xf32, #tpu.memory_space<vmem>>, vector<2x32xf32>,
    %c0_9 = arith.constant 0 : index
    %c0_10 = arith.constant 0 : index
    %11 = vector.load %arg4[%c0_9, %c0_10] : memref<32x128xf32, #tpu.memory_space<vmem>>, vector<32x128xf32>
    %cst_11 = arith.constant dense<0.000000e+00> : vector<2x128xf32>
    %12 = tpu.matmul %0, %11, %cst_11 {dimension_numbers = #tpu.dot_dimension_numbers<[1], [0], [0], [1], [0, 0, 1, 1], [], []>} : vector<2x32xf32>, vector<32x128xf32>, vector<2x128xf32> -> vector<2x128xf32>
    %c0_12 = arith.constant 0 : index
    %c0_13 = arith.constant 0 : index
    %13 = vector.load %arg5[%c0_12, %c0_13] : memref<32x128xf32, #tpu.memory_space<vmem>>, vector<32x128xf32>
    %cst_14 = arith.constant dense<0.000000e+00> : vector<2x128xf32>
    %14 = tpu.matmul %1, %13, %cst_14 {dimension_numbers = #tpu.dot_dimension_numbers<[1], [0], [0], [1], [0, 0, 1, 1], [], []>} : vector<2x32xf32>, vector<32x128xf32>, vector<2x128xf32> -> vector<2x128xf32>
    %15 = arith.addf %12, %14 : vector<2x128xf32>
    %c0_15 = arith.constant 0 : index
    %c0_16 = arith.constant 0 : index
    %16 = vector.load %arg6[%c0_15, %c0_16] : memref<32x128xf32, #tpu.memory_space<vmem>>, vector<32x128xf32>
    %cst_17 = arith.constant dense<0.000000e+00> : vector<2x128xf32>
    %17 = tpu.matmul %9, %16, %cst_17 {dimension_numbers = #tpu.dot_dimension_numbers<[1], [0], [0], [1], [0, 0, 1, 1], [], []>} : vector<2x32xf32>, vector<32x128xf32>, vector<2x128xf32> -> vector<2x128xf32>
    %18 = arith.addf %15, %17 : vector<2x128xf32>
    %c0_18 = arith.constant 0 : index
    %c0_19 = arith.constant 0 : index
    %19 = vector.load %arg7[%c0_18, %c0_19] : memref<1x128xf32, #tpu.memory_space<vmem>>, vector<1x128xf32>
    %20 = vector.broadcast %19 : vector<1x128xf32> to vector<2x128xf32>
    %21 = arith.addf %18, %20 : vector<2x128xf32>
    %22 = vector.extract_strided_slice %21 {offsets = [0, 0], sizes = [2, 64], strides = [1, 1]} : vector<2x128xf32> to vector<2x64xf32>
    %23 = math.tanh %22 : vector<2x64xf32>
    %24 = vector.extract_strided_slice %21 {offsets = [0, 64], sizes = [2, 64], strides = [1, 1]} : vector<2x128xf32> to vector<2x64xf32>
    %25 = arith.negf %24 : vector<2x64xf32>
    %26 = math.exp %25 : vector<2x64xf32>
    %cst_20 = arith.constant 1.000000e+00 : f32
    %27 = vector.broadcast %cst_20 : f32 to vector<2x64xf32>
    %28 = arith.addf %27, %26 : vector<2x64xf32>
    %29 = arith.divf %27, %28 : vector<2x64xf32>
    %30 = arith.mulf %23, %29 : vector<2x64xf32>
    %c0_21 = arith.constant 0 : index
    %c0_22 = arith.constant 0 : index
    %31 = vector.load %arg8[%c0_21, %c0_22] : memref<2x64xf32, #tpu.memory_space<vmem>>, vector<2x64xf32>
    tpu.vector_store %arg8[%c0_21, %c0_22], %30 {strides = array<i32>} : memref<2x64xf32, #tpu.memory_space<vmem>>, vector<2x64xf32>,
    return
  }
}

</mosaic_0001>

<llo_original>
// kernel: tpu_custom_call.1
$region0: #{tpu_custom_call.1}
  #allocation0 [shape = 'u32[]', space=smem, size = 0x4, offset = 0x4, fixed_abs, tag = 'smem constant byte address 0x4 - core index']
  #allocation1 [shape = 'u32[144,128]{1,0:T(1,128)}', space=vmem, size = 0x12000, scoped, tag = 'internal scratch']
  %s0 = inlined_call_operand.vmem [shape: f32[2,32], index: 0, kind: input, shape index: {}]
  %s1 = inlined_call_operand.vmem [shape: f32[2,32], index: 1, kind: input, shape index: {}]
  %s2 = inlined_call_operand.vmem [shape: s32[2,1], index: 2, kind: input, shape index: {}]
  %s3 = inlined_call_operand.vmem [shape: f32[4,32], index: 3, kind: input, shape index: {}]
  %s4 = inlined_call_operand.hbm [shape: f32[32,128], index: 4, kind: input, shape index: {}]
  %s5 = inlined_call_operand.hbm [shape: f32[32,128], index: 5, kind: input, shape index: {}]
  %s6 = inlined_call_operand.hbm [shape: f32[32,128], index: 6, kind: input, shape index: {}]
  %s7 = inlined_call_operand.vmem [shape: f32[1,128], index: 7, kind: input, shape index: {}]
  %s8 = inlined_call_operand.hbm [shape: f32[2,64], index: 8, kind: output, shape index: {0}]
  %s9 = inlined_call_operand.hbm [shape: f32[2,32], index: 9, kind: output, shape index: {1}]
  %10 = xla_tuple %s8, %s9
  %s11 = sld [smem:[#allocation0]]
  $region62: #{tpu_custom_call.1} parent=0
    _
  %s13 = ssub.s32 1, %s11
  %s14 = scalar_select 0, %s13, %s11
  $region1: #{tpu_custom_call.1} parent=0
    #allocation2 [shape = 'u8[16384]{0}', space=vmem, size = 0x4000, scoped, tag = 'input window, operand 4, single buffered']
    #allocation3 [shape = 's32[1]{0}', space=sflag, size = 0x4, scoped, tag = 'scoped memory for tpu_custom_call.1']
    #allocation4 [shape = 's32[1]{0}', space=sflag, size = 0x4, scoped, tag = 'scoped memory for tpu_custom_call.1']
    #allocation5 [shape = 'u8[16384]{0}', space=vmem, size = 0x4000, scoped, tag = 'input window, operand 5, single buffered']
    #allocation6 [shape = 's32[1]{0}', space=sflag, size = 0x4, scoped, tag = 'scoped memory for tpu_custom_call.1']
    #allocation7 [shape = 'u8[16384]{0}', space=vmem, size = 0x4000, scoped, tag = 'input window, operand 6, single buffered']
    #allocation8 [shape = 'u8[1024]{0}', space=vmem, size = 0x400, scoped, tag = 'output window, operand 0, single buffered']
    #allocation9 [shape = 'u8[1024]{0}', space=vmem, size = 0x400, scoped, tag = 'output window, operand 1, single buffered']
    #allocation10 [shape = 's32[1]{0}', space=sflag, size = 0x4, scoped, tag = 'scoped memory for tpu_custom_call.1']
    %15 = vsyncpa [#allocation3], 0
    %16 = vsyncpa [#allocation6], 0
    %17 = vsyncpa [#allocation4], 0
    %18 = vsyncpa [#allocation10], 0
    // Predicated region
    $region2: #{tpu_custom_call.1} parent=1 // pred_check
      _
    $region3: #{tpu_custom_call.1} parent=1 // pred_check_branch
      %20 = sbr.rel (0) target = $region5
    $region4: #{tpu_custom_call.1} parent=1 // pred_region
      _
    $region5: #{tpu_custom_call.1} parent=1 // pred_fallthru
      _
    // Predicated region
    $region6: #{tpu_custom_call.1} parent=1 // pred_check
      _
    $region7: #{tpu_custom_call.1} parent=1 // pred_check_branch
      %22 = sbr.rel (0) target = $region9
    $region8: #{tpu_custom_call.1} parent=1 // pred_region
      _
    $region9: #{tpu_custom_call.1} parent=1 // pred_fallthru
      _
    // Predicated region
    $region10: #{tpu_custom_call.1} parent=1 // pred_check
      _
    $region11: #{tpu_custom_call.1} parent=1 // pred_check_branch
      %24 = sbr.rel (0) target = $region13
    $region12: #{tpu_custom_call.1} parent=1 // pred_region
      _
    $region13: #{tpu_custom_call.1} parent=1 // pred_fallthru
      _
    // Predicated region
    $region14: #{tpu_custom_call.1} parent=1 // pred_check
      _
    $region15: #{tpu_custom_call.1} parent=1 // pred_check_branch
      %26 = sbr.rel (0) target = $region17
    $region16: #{tpu_custom_call.1} parent=1 // pred_region
      _
    $region17: #{tpu_custom_call.1} parent=1 // pred_fallthru
      _
    // Predicated region
    $region18: #{tpu_custom_call.1} parent=1 // pred_check
      _
    $region19: #{tpu_custom_call.1} parent=1 // pred_check_branch
      %28 = sbr.rel (0) target = $region21
    $region20: #{tpu_custom_call.1} parent=1 // pred_region
      %s30 = ssub.s32 512, 512
      %31 = vsyncadd [#allocation3], %s30
      %s32 = sshll.u32 [#allocation2], 4
      %s33 = int_to_ptr.vmem [resolvable:$true] %s32
      %38 = dma.hbm_to_vmem [thread:$0]  %s4, 512, %s33, [#allocation3], 128, 128, 8
    $region21: #{tpu_custom_call.1} parent=1 // pred_fallthru
      _
    // Predicated region
    $region22: #{tpu_custom_call.1} parent=1 // pred_check
      _
    $region23: #{tpu_custom_call.1} parent=1 // pred_check_branch
      %40 = sbr.rel (0) target = $region25
    $region24: #{tpu_custom_call.1} parent=1 // pred_region
      %s42 = ssub.s32 512, 512
      %43 = vsyncadd [#allocation6], %s42
      %s44 = sshll.u32 [#allocation5], 4
      %s45 = int_to_ptr.vmem [resolvable:$true] %s44
      %50 = dma.hbm_to_vmem [thread:$0]  %s5, 512, %s45, [#allocation6], 128, 128, 8
    $region25: #{tpu_custom_call.1} parent=1 // pred_fallthru
      _
    // Predicated region
    $region26: #{tpu_custom_call.1} parent=1 // pred_check
      _
    $region27: #{tpu_custom_call.1} parent=1 // pred_check_branch
      %52 = sbr.rel (0) target = $region29
    $region28: #{tpu_custom_call.1} parent=1 // pred_region
      %s54 = ssub.s32 512, 512
      %55 = vsyncadd [#allocation6], %s54
      %s56 = sshll.u32 [#allocation7], 4
      %s57 = int_to_ptr.vmem [resolvable:$true] %s56
      %62 = dma.hbm_to_vmem [thread:$0]  %s6, 512, %s57, [#allocation6], 128, 128, 8
    $region29: #{tpu_custom_call.1} parent=1 // pred_fallthru
      _
    // Predicated region
    $region30: #{tpu_custom_call.1} parent=1 // pred_check
      _
    $region31: #{tpu_custom_call.1} parent=1 // pred_check_branch
      %64 = sbr.rel (0) target = $region33
    $region32: #{tpu_custom_call.1} parent=1 // pred_region
      _
    $region33: #{tpu_custom_call.1} parent=1 // pred_fallthru
      _
    // Predicated region
    $region34: #{tpu_custom_call.1} parent=1 // pred_check
      _
    $region35: #{tpu_custom_call.1} parent=1 // pred_check_branch
      %66 = sbr.rel (0) target = $region37
    $region36: #{tpu_custom_call.1} parent=1 // pred_region
      %67 = dma.done [#allocation3], 512
    $region37: #{tpu_custom_call.1} parent=1 // pred_fallthru
      _
    // Predicated region
    $region38: #{tpu_custom_call.1} parent=1 // pred_check
      _
    $region39: #{tpu_custom_call.1} parent=1 // pred_check_branch
      %69 = sbr.rel (0) target = $region41
    $region40: #{tpu_custom_call.1} parent=1 // pred_region
      %70 = dma.done [#allocation6], 512
    $region41: #{tpu_custom_call.1} parent=1 // pred_fallthru
      _
    // Predicated region
    $region42: #{tpu_custom_call.1} parent=1 // pred_check
      _
    $region43: #{tpu_custom_call.1} parent=1 // pred_check_branch
      %72 = sbr.rel (0) target = $region45
    $region44: #{tpu_custom_call.1} parent=1 // pred_region
      %73 = dma.done [#allocation6], 512
    $region45: #{tpu_custom_call.1} parent=1 // pred_fallthru
      _
    %v74 = vld [vmem:[%s0] sm:$0x3]
    %v75 = vld [vmem:[%s1] sm:$0x3]
    %v76 = vld [vmem:[%s2] sm:$0x3]
    %v77 = vld [vmem:[%s3] sm:$0xf]
    %v78 = vlaneseq
    %v79 = vand.u32 %v78, 127
    %80 = vset.pattern.permute.xlu0 0
    %81 = vperm.xlu0 %80, %v76
    %v82 = vpop.permute.xlu0 %81
    %vm83 = vcmp.eq.s32.totalorder %v82, %v79
    %v84 = vsel %vm83, 1, 0
    %v85 = vcvt.s32.f32 %v84
    %vm86 = vcmask 31744
    %v88 = vsel %vm86, %v85, 0
    %vm90 = vcmask 1043456
    %v92 = vsel %vm90, %v77, 0
    %94 = vmatprep.subr.mxu0 0.0
    %95 = vmatpush1.msra.mxu0 0.0
    %96 = vmatprep.subr.mxu0 0.0
    %97 = vmatpush1.msra.mxu0 0.0
    %98 = vmatprep.subr.mxu0 0.0
    %99 = vmatpush1.msra.mxu0 0.0
    %100 = vmatprep.subr.mxu0 0.0
    %101 = vmatpush1.msra.mxu0 0.0
    %102 = vmatprep.subr.mxu0 0.0
    %103 = vmatpush1.msra.mxu0 0.0
    %104 = vmatprep.subr.mxu0 0.0
    %105 = vmatpush1.msra.mxu0 0.0
    %106 = vmatprep.subr.mxu0 0.0
    %107 = vmatpush1.msra.mxu0 0.0
    %108 = vmatprep.subr.mxu0 0.0
    %109 = vmatpush1.msra.mxu0 0.0
    %110 = vmatprep.subr.mxu0 0.0
    %111 = vmatpush1.msra.mxu0 0.0
    %112 = vmatprep.subr.mxu0 0.0
    %113 = vmatpush1.msra.mxu0 0.0
    %114 = vmatprep.subr.mxu0 0.0
    %115 = vmatpush1.msra.mxu0 0.0
    %116 = vmatprep.subr.mxu0 0.0
    %117 = vmatpush1.msra.mxu0 0.0
    %118 = vmatprep.subr.mxu0 0.0
    %119 = vmatpush1.msra.mxu0 0.0
    %120 = vmatprep.subr.mxu0 0.0
    %121 = vmatpush1.msra.mxu0 0.0
    %122 = vmatprep.subr.mxu0 0.0
    %123 = vmatpush1.msra.mxu0 0.0
    %124 = vmatprep.subr.mxu0 0.0
    %125 = vmatpush1.msra.mxu0 %v92
    %126 = vmatprep.subr.mxu0 0.0
    %127 = vmatpush2.msra.mxu0 0.0
    %128 = vmatprep.subr.mxu0 0.0
    %129 = vmatpush2.msra.mxu0 0.0
    %130 = vmatprep.subr.mxu0 0.0
    %131 = vmatpush2.msra.mxu0 0.0
    %132 = vmatprep.subr.mxu0 0.0
    %133 = vmatpush2.msra.mxu0 0.0
    %134 = vmatprep.subr.mxu0 0.0
    %135 = vmatpush2.msra.mxu0 0.0
    %136 = vmatprep.subr.mxu0 0.0
    %137 = vmatpush2.msra.mxu0 0.0
    %138 = vmatprep.subr.mxu0 0.0
    %139 = vmatpush2.msra.mxu0 0.0
    %140 = vmatprep.subr.mxu0 0.0
    %141 = vmatpush2.msra.mxu0 0.0
    %142 = vmatprep.subr.mxu0 0.0
    %143 = vmatpush2.msra.mxu0 0.0
    %144 = vmatprep.subr.mxu0 0.0
    %145 = vmatpush2.msra.mxu0 0.0
    %146 = vmatprep.subr.mxu0 0.0
    %147 = vmatpush2.msra.mxu0 0.0
    %148 = vmatprep.subr.mxu0 0.0
    %149 = vmatpush2.msra.mxu0 0.0
    %150 = vmatprep.subr.mxu0 0.0
    %151 = vmatpush2.msra.mxu0 0.0
    %152 = vmatprep.subr.mxu0 0.0
    %153 = vmatpush2.msra.mxu0 0.0
    %154 = vmatprep.subr.mxu0 0.0
    %155 = vmatpush2.msra.mxu0 0.0
    %156 = vmatprep.subr.mxu0 0.0
    %157 = vmatpush2.msra.mxu0 0.0
    %158 = vmatprep.mubr.f32.mxu0 0.0
    %159 = vmatmul.mubr.f32.gmra.mxu0 %v88
    %v160 = vpop.f32.mrf.mxu0
    %v161 = vadd.f32 0.0, %v160
    %v162 = vpop.f32.mrf.mxu0
    %163 = vdwg.mxu0
    %vm164 = vcmask 254976
    %165 = vst.msk [vmem:[#allocation9] sm:$0x3] %vm164, %v161
    %v166 = vld [vmem:[#allocation2] sm:$0xff]
    %v167 = vld [vmem:[#allocation2 + $0x8] sm:$0xff]
    %v168 = vld [vmem:[#allocation2 + $0x10] sm:$0xff]
    %v169 = vld [vmem:[#allocation2 + $0x18] sm:$0xff]
    %v170 = vld [vmem:[#allocation5] sm:$0xff]
    %v171 = vld [vmem:[#allocation5 + $0x8] sm:$0xff]
    %v172 = vld [vmem:[#allocation5 + $0x10] sm:$0xff]
    %v173 = vld [vmem:[#allocation5 + $0x18] sm:$0xff]
    %vm174 = vcmask 261120
    %v176 = vsel %vm174, %v75, 0
    %178 = vmatprep.subr.mxu0 0.0
    %179 = vmatpush1.msra.mxu0 0.0
    %180 = vmatprep.subr.mxu0 0.0
    %181 = vmatpush1.msra.mxu0 0.0
    %182 = vmatprep.subr.mxu0 0.0
    %183 = vmatpush1.msra.mxu0 0.0
    %184 = vmatprep.subr.mxu0 0.0
    %185 = vmatpush1.msra.mxu0 0.0
    %186 = vmatprep.subr.mxu0 0.0
    %187 = vmatpush1.msra.mxu0 0.0
    %188 = vmatprep.subr.mxu0 0.0
    %189 = vmatpush1.msra.mxu0 0.0
    %190 = vmatprep.subr.mxu0 0.0
    %191 = vmatpush1.msra.mxu0 0.0
    %192 = vmatprep.subr.mxu0 0.0
    %193 = vmatpush1.msra.mxu0 0.0
    %194 = vmatprep.subr.mxu0 0.0
    %195 = vmatpush1.msra.mxu0 0.0
    %196 = vmatprep.subr.mxu0 0.0
    %197 = vmatpush1.msra.mxu0 0.0
    %198 = vmatprep.subr.mxu0 0.0
    %199 = vmatpush1.msra.mxu0 0.0
    %200 = vmatprep.subr.mxu0 0.0
    %201 = vmatpush1.msra.mxu0 0.0
    %202 = vmatprep.subr.mxu0 0.0
    %203 = vmatpush1.msra.mxu0 %v173
    %204 = vmatprep.subr.mxu0 0.0
    %205 = vmatpush1.msra.mxu0 %v172
    %206 = vmatprep.subr.mxu0 0.0
    %207 = vmatpush1.msra.mxu0 %v171
    %208 = vmatprep.subr.mxu0 0.0
    %209 = vmatpush1.msra.mxu0 %v170
    %210 = vmatprep.subr.mxu0 0.0
    %211 = vmatpush2.msra.mxu0 0.0
    %212 = vmatprep.subr.mxu0 0.0
    %213 = vmatpush2.msra.mxu0 0.0
    %214 = vmatprep.subr.mxu0 0.0
    %215 = vmatpush2.msra.mxu0 0.0
    %216 = vmatprep.subr.mxu0 0.0
    %217 = vmatpush2.msra.mxu0 0.0
    %218 = vmatprep.subr.mxu0 0.0
    %219 = vmatpush2.msra.mxu0 0.0
    %220 = vmatprep.subr.mxu0 0.0
    %221 = vmatpush2.msra.mxu0 0.0
    %222 = vmatprep.subr.mxu0 0.0
    %223 = vmatpush2.msra.mxu0 0.0
    %224 = vmatprep.subr.mxu0 0.0
    %225 = vmatpush2.msra.mxu0 0.0
    %226 = vmatprep.subr.mxu0 0.0
    %227 = vmatpush2.msra.mxu0 0.0
    %228 = vmatprep.subr.mxu0 0.0
    %229 = vmatpush2.msra.mxu0 0.0
    %230 = vmatprep.subr.mxu0 0.0
    %231 = vmatpush2.msra.mxu0 0.0
    %232 = vmatprep.subr.mxu0 0.0
    %233 = vmatpush2.msra.mxu0 0.0
    %234 = vmatprep.subr.mxu0 0.0
    %235 = vmatpush2.msra.mxu0 0.0
    %236 = vmatprep.subr.mxu0 0.0
    %237 = vmatpush2.msra.mxu0 0.0
    %238 = vmatprep.subr.mxu0 0.0
    %239 = vmatpush2.msra.mxu0 0.0
    %240 = vmatprep.subr.mxu0 0.0
    %241 = vmatpush2.msra.mxu0 0.0
    %242 = vmatprep.mubr.f32.mxu0 0.0
    %243 = vmatmul.mubr.f32.gmra.mxu0 %v176
    %v244 = vpop.f32.mrf.mxu0
    %v245 = vadd.f32 0.0, %v244
    %v246 = vpop.f32.mrf.mxu0
    %247 = vdwg.mxu0
    %v249 = vsel %vm174, %v74, 0
    %251 = vmatprep.subr.mxu0 0.0
    %252 = vmatpush1.msra.mxu0 0.0
    %253 = vmatprep.subr.mxu0 0.0
    %254 = vmatpush1.msra.mxu0 0.0
    %255 = vmatprep.subr.mxu0 0.0
    %256 = vmatpush1.msra.mxu0 0.0
    %257 = vmatprep.subr.mxu0 0.0
    %258 = vmatpush1.msra.mxu0 0.0
    %259 = vmatprep.subr.mxu0 0.0
    %260 = vmatpush1.msra.mxu0 0.0
    %261 = vmatprep.subr.mxu0 0.0
    %262 = vmatpush1.msra.mxu0 0.0
    %263 = vmatprep.subr.mxu0 0.0
    %264 = vmatpush1.msra.mxu0 0.0
    %265 = vmatprep.subr.mxu0 0.0
    %266 = vmatpush1.msra.mxu0 0.0
    %267 = vmatprep.subr.mxu0 0.0
    %268 = vmatpush1.msra.mxu0 0.0
    %269 = vmatprep.subr.mxu0 0.0
    %270 = vmatpush1.msra.mxu0 0.0
    %271 = vmatprep.subr.mxu0 0.0
    %272 = vmatpush1.msra.mxu0 0.0
    %273 = vmatprep.subr.mxu0 0.0
    %274 = vmatpush1.msra.mxu0 0.0
    %275 = vmatprep.subr.mxu0 0.0
    %276 = vmatpush1.msra.mxu0 %v169
    %277 = vmatprep.subr.mxu0 0.0
    %278 = vmatpush1.msra.mxu0 %v168
    %279 = vmatprep.subr.mxu0 0.0
    %280 = vmatpush1.msra.mxu0 %v167
    %281 = vmatprep.subr.mxu0 0.0
    %282 = vmatpush1.msra.mxu0 %v166
    %283 = vmatprep.subr.mxu0 0.0
    %284 = vmatpush2.msra.mxu0 0.0
    %285 = vmatprep.subr.mxu0 0.0
    %286 = vmatpush2.msra.mxu0 0.0
    %287 = vmatprep.subr.mxu0 0.0
    %288 = vmatpush2.msra.mxu0 0.0
    %289 = vmatprep.subr.mxu0 0.0
    %290 = vmatpush2.msra.mxu0 0.0
    %291 = vmatprep.subr.mxu0 0.0
    %292 = vmatpush2.msra.mxu0 0.0
    %293 = vmatprep.subr.mxu0 0.0
    %294 = vmatpush2.msra.mxu0 0.0
    %295 = vmatprep.subr.mxu0 0.0
    %296 = vmatpush2.msra.mxu0 0.0
    %297 = vmatprep.subr.mxu0 0.0
    %298 = vmatpush2.msra.mxu0 0.0
    %299 = vmatprep.subr.mxu0 0.0
    %300 = vmatpush2.msra.mxu0 0.0
    %301 = vmatprep.subr.mxu0 0.0
    %302 = vmatpush2.msra.mxu0 0.0
    %303 = vmatprep.subr.mxu0 0.0
    %304 = vmatpush2.msra.mxu0 0.0
    %305 = vmatprep.subr.mxu0 0.0
    %306 = vmatpush2.msra.mxu0 0.0
    %307 = vmatprep.subr.mxu0 0.0
    %308 = vmatpush2.msra.mxu0 0.0
    %309 = vmatprep.subr.mxu0 0.0
    %310 = vmatpush2.msra.mxu0 0.0
    %311 = vmatprep.subr.mxu0 0.0
    %312 = vmatpush2.msra.mxu0 0.0
    %313 = vmatprep.subr.mxu0 0.0
    %314 = vmatpush2.msra.mxu0 0.0
    %315 = vmatprep.mubr.f32.mxu0 0.0
    %316 = vmatmul.mubr.f32.gmra.mxu0 %v249
    %v317 = vpop.f32.mrf.mxu0
    %v318 = vadd.f32 %v245, %v317
    %v319 = vpop.f32.mrf.mxu0
    %320 = vdwg.mxu0
    %v321 = vld [vmem:[#allocation7] sm:$0xff]
    %v322 = vld [vmem:[#allocation7 + $0x8] sm:$0xff]
    %v323 = vld [vmem:[#allocation7 + $0x10] sm:$0xff]
    %v324 = vld [vmem:[#allocation7 + $0x18] sm:$0xff]
    %v326 = vsel %vm174, %v161, 0
    %328 = vmatprep.subr.mxu0 0.0
    %329 = vmatpush1.msra.mxu0 0.0
    %330 = vmatprep.subr.mxu0 0.0
    %331 = vmatpush1.msra.mxu0 0.0
    %332 = vmatprep.subr.mxu0 0.0
    %333 = vmatpush1.msra.mxu0 0.0
    %334 = vmatprep.subr.mxu0 0.0
    %335 = vmatpush1.msra.mxu0 0.0
    %336 = vmatprep.subr.mxu0 0.0
    %337 = vmatpush1.msra.mxu0 0.0
    %338 = vmatprep.subr.mxu0 0.0
    %339 = vmatpush1.msra.mxu0 0.0
    %340 = vmatprep.subr.mxu0 0.0
    %341 = vmatpush1.msra.mxu0 0.0
    %342 = vmatprep.subr.mxu0 0.0
    %343 = vmatpush1.msra.mxu0 0.0
    %344 = vmatprep.subr.mxu0 0.0
    %345 = vmatpush1.msra.mxu0 0.0
    %346 = vmatprep.subr.mxu0 0.0
    %347 = vmatpush1.msra.mxu0 0.0
    %348 = vmatprep.subr.mxu0 0.0
    %349 = vmatpush1.msra.mxu0 0.0
    %350 = vmatprep.subr.mxu0 0.0
    %351 = vmatpush1.msra.mxu0 0.0
    %352 = vmatprep.subr.mxu0 0.0
    %353 = vmatpush1.msra.mxu0 %v324
    %354 = vmatprep.subr.mxu0 0.0
    %355 = vmatpush1.msra.mxu0 %v323
    %356 = vmatprep.subr.mxu0 0.0
    %357 = vmatpush1.msra.mxu0 %v322
    %358 = vmatprep.subr.mxu0 0.0
    %359 = vmatpush1.msra.mxu0 %v321
    %360 = vmatprep.subr.mxu0 0.0
    %361 = vmatpush2.msra.mxu0 0.0
    %362 = vmatprep.subr.mxu0 0.0
    %363 = vmatpush2.msra.mxu0 0.0
    %364 = vmatprep.subr.mxu0 0.0
    %365 = vmatpush2.msra.mxu0 0.0
    %366 = vmatprep.subr.mxu0 0.0
    %367 = vmatpush2.msra.mxu0 0.0
    %368 = vmatprep.subr.mxu0 0.0
    %369 = vmatpush2.msra.mxu0 0.0
    %370 = vmatprep.subr.mxu0 0.0
    %371 = vmatpush2.msra.mxu0 0.0
    %372 = vmatprep.subr.mxu0 0.0
    %373 = vmatpush2.msra.mxu0 0.0
    %374 = vmatprep.subr.mxu0 0.0
    %375 = vmatpush2.msra.mxu0 0.0
    %376 = vmatprep.subr.mxu0 0.0
    %377 = vmatpush2.msra.mxu0 0.0
    %378 = vmatprep.subr.mxu0 0.0
    %379 = vmatpush2.msra.mxu0 0.0
    %380 = vmatprep.subr.mxu0 0.0
    %381 = vmatpush2.msra.mxu0 0.0
    %382 = vmatprep.subr.mxu0 0.0
    %383 = vmatpush2.msra.mxu0 0.0
    %384 = vmatprep.subr.mxu0 0.0
    %385 = vmatpush2.msra.mxu0 0.0
    %386 = vmatprep.subr.mxu0 0.0
    %387 = vmatpush2.msra.mxu0 0.0
    %388 = vmatprep.subr.mxu0 0.0
    %389 = vmatpush2.msra.mxu0 0.0
    %390 = vmatprep.subr.mxu0 0.0
    %391 = vmatpush2.msra.mxu0 0.0
    %392 = vmatprep.mubr.f32.mxu0 0.0
    %393 = vmatmul.mubr.f32.gmra.mxu0 %v326
    %v394 = vpop.f32.mrf.mxu0
    %v395 = vadd.f32 0.0, %v394
    %v396 = vpop.f32.mrf.mxu0
    %397 = vdwg.mxu0
    %v398 = vadd.f32 %v318, %v395
    %v399 = vld [vmem:[%s7] sm:$0x1]
    %v401 = vlaneseq
    %v402 = vshrl.u32 %v401, 7
    %v403 = vsub.s32 0, %v402
    %v404 = vrot.slane %v399, %v403
    %v406 = vadd.f32 %v398, %v404
    %v407 = vtanh.pop %v406
    %v408 = vxor.u32 %v406, 2147483648
    %v409 = vmul.f32 %v408, 1.442695
    %v410 = vpow.pop %v409
    %v411 = vadd.f32 %v410, 1.0
    %v412 = vrcp.pop %v411
    %v413 = vmul.f32 1.0, %v412
    %415 = vrot.lane.b32.xlu0 %v413, 64
    %v416 = vpop.permute.xlu0 %415
    %v418 = vmul.f32 %v407, %v416
    %vm419 = vcmask 517120
    %420 = vst.msk [vmem:[#allocation8] sm:$0x3] %vm419, %v418
    // Predicated region
    $region46: #{tpu_custom_call.1} parent=1 // pred_check
      _
    $region47: #{tpu_custom_call.1} parent=1 // pred_check_branch
      %422 = sbr.rel (0) target = $region49
    $region48: #{tpu_custom_call.1} parent=1 // pred_region
      %s424 = ssub.s32 32, 32
      %425 = vsyncadd [#allocation4], %s424
      %s427 = sshll.u32 [#allocation8], 4
      %s428 = int_to_ptr.vmem [resolvable:$true] %s427
      %430 = dma.vmem_to_hbm [thread:$0]  %s428, 32, %s8, [#allocation4]
    $region49: #{tpu_custom_call.1} parent=1 // pred_fallthru
      _
    // Predicated region
    $region50: #{tpu_custom_call.1} parent=1 // pred_check
      _
    $region51: #{tpu_custom_call.1} parent=1 // pred_check_branch
      %432 = sbr.rel (0) target = $region53
    $region52: #{tpu_custom_call.1} parent=1 // pred_region
      %s434 = ssub.s32 32, 32
      %435 = vsyncadd [#allocation10], %s434
      %s437 = sshll.u32 [#allocation9], 4
      %s438 = int_to_ptr.vmem [resolvable:$true] %s437
      %440 = dma.vmem_to_hbm [thread:$0]  %s438, 32, %s9, [#allocation10]
    $region53: #{tpu_custom_call.1} parent=1 // pred_fallthru
      _
    // Predicated region
    $region54: #{tpu_custom_call.1} parent=1 // pred_check
      _
    $region55: #{tpu_custom_call.1} parent=1 // pred_check_branch
      %442 = sbr.rel (0) target = $region57
    $region56: #{tpu_custom_call.1} parent=1 // pred_region
      %443 = dma.done [#allocation4], 32
    $region57: #{tpu_custom_call.1} parent=1 // pred_fallthru
      _
    // Predicated region
    $region58: #{tpu_custom_call.1} parent=1 // pred_check
      _
    $region59: #{tpu_custom_call.1} parent=1 // pred_check_branch
      %445 = sbr.rel (0) target = $region61
    $region60: #{tpu_custom_call.1} parent=1 // pred_region
      %446 = dma.done [#allocation10], 32
    $region61: #{tpu_custom_call.1} parent=1 // pred_fallthru
      _
    %447 = vsyncpa [#allocation3], 1
    %448 = vsyncpa [#allocation6], 1
    %449 = vsyncpa [#allocation4], 1
    %450 = vsyncpa [#allocation10], 1

</llo_original>
